<compile_context>
chip_gen: v6e
topology: v6e:2x2x1
jax: 0.10.0
libtpu: 0.0.40
codegen_flags: <defaults>
</compile_context>

<pallas_src>
import jax
import jax.numpy as jnp
from jax.experimental import pallas as pl
from jax.experimental.pallas import tpu as pltpu


def _round_up(a, b):
    return (a + b - 1) // b * b


def deep_probability_kernel(x_ref, w0_ref, b0_ref, w1_ref, b1_ref, o_ref):
    # fc_0 (block-diagonal, packed): (TB, Dp) @ (Dp, Dp) on the MXU, bf16 in /
    # f32 accumulation.  x is cast in-kernel (cheap VPU op) so HBM only carries
    # one f32 pass over x and no extra XLA convert pass is introduced.
    x = x_ref[...].astype(jnp.bfloat16)
    h = jnp.dot(x, w0_ref[...], preferred_element_type=jnp.float32)
    h = h + b0_ref[...]
    # LeakyReLU(0.2) as max(h, 0.2*h): one vmul + one vmax, no cmp/select.
    h = jnp.maximum(h, 0.2 * h)
    # fc_1 (block-diagonal): (TB, Dp) @ (Dp, Mp), bf16 in / f32 out.
    logits = jnp.dot(h.astype(jnp.bfloat16), w1_ref[...],
                     preferred_element_type=jnp.float32)
    logits = logits + b1_ref[...]
    # Numerically stable sigmoid: z = exp(-|l|) lies in (0, 1]; no inf/NaN path.
    z = jnp.exp(-jnp.abs(logits))
    r = pl.reciprocal(1.0 + z, approx=True)
    o_ref[...] = jnp.where(logits >= 0, r, z * r).astype(o_ref.dtype)


def deep_probability(x, w0, b0, w1, b1, *, max_packed_tile=1024):
    """DeepProbability forward: sigmoid(fc_1(leaky_relu(fc_0(x), 0.2))).

    x: (B, D); w0: (D, D); b0: (D,); w1: (D, M); b1: (M,)  ->  (B, M).
    """
    B, D = x.shape
    M = w1.shape[1]

    # Pack factor: how many batch rows share one 128-lane row.  Block-diagonal
    # weights keep each row's math identical to the unpacked Linear layers.
    pack = 128 // D if (D <= 128 and 128 % D == 0) else 1

    # Pad the batch only as far as the packed view needs:
    #   * up to (pack - 1) rows so B is a multiple of `pack`,
    #   * up to 8 packed rows total so the packed array spans one sublane tile.
    # No padding to a tile multiple -- the ragged last grid block is masked.
    b_pad = max(_round_up(B, pack), 8 * pack)
    if b_pad != B:
        x = jnp.pad(x, ((0, b_pad - B), (0, 0)))
    bp = b_pad // pack
    dp = pack * D
    mp = pack * M

    xp = x.reshape(bp, dp)                              # free row-major view

    eye = jnp.eye(pack, dtype=w0.dtype)
    w0_bd = jnp.kron(eye, w0).astype(jnp.bfloat16)      # (dp, dp) block-diag
    w1_bd = jnp.kron(eye, w1).astype(jnp.bfloat16)      # (dp, mp) block-diag
    b0_bd = jnp.tile(b0, pack).reshape(1, dp)           # f32 epilogue bias
    b1_bd = jnp.tile(b1, pack).reshape(1, mp)

    # Batch tile over packed rows: large enough to amortize per-step overhead,
    # split >= 2 ways when possible so v7x megacore uses both TensorCores.
    tbp = min(max_packed_tile, _round_up(pl.cdiv(bp, 2), 8))
    grid = (pl.cdiv(bp, tbp),)

    cost = pl.CostEstimate(
        flops=2 * bp * dp * dp + 2 * bp * dp * mp,
        transcendentals=bp * mp,
        bytes_accessed=(4 * bp * dp                     # x (f32 in)
                        + 2 * (dp * dp + dp * mp)       # bf16 weights
                        + 4 * (dp + mp)                 # f32 biases
                        + 4 * bp * mp),                 # f32 out
    )

    out_packed = pl.pallas_call(
        deep_probability_kernel,
        out_shape=jax.ShapeDtypeStruct((bp, mp), x.dtype),
        grid=grid,
        in_specs=[
            pl.BlockSpec((tbp, dp), lambda i: (i, 0)),  # x   (batch-tiled)
            pl.BlockSpec((dp, dp), lambda i: (0, 0)),   # W0 block-diag (resident)
            pl.BlockSpec((1, dp), lambda i: (0, 0)),    # b0
            pl.BlockSpec((dp, mp), lambda i: (0, 0)),   # W1 block-diag
            pl.BlockSpec((1, mp), lambda i: (0, 0)),    # b1
        ],
        out_specs=pl.BlockSpec((tbp, mp), lambda i: (i, 0)),
        compiler_params=pltpu.CompilerParams(
            dimension_semantics=("parallel",)),         # megacore on v7x
        cost_estimate=cost,
    )(xp, w0_bd, b0_bd, w1_bd, b1_bd)

    # (bp, pack*M) -> (b_pad, M) is a free row-major reshape; trim the pad.
    out = out_packed.reshape(b_pad, M)
    return out[:B] if b_pad != B else out


def reference(x, w0, b0, w1, b1):
    h = x @ w0 + b0
    h = jnp.where(h > 0, h, 0.2 * h)
    return jax.nn.sigmoid(h @ w1 + b1)


if __name__ == "__main__":
    D = 32           # input_dims (fe.feature_shape)
    M = 8            # n_primitives

    key = jax.random.PRNGKey(0)
    k_x, k_w0, k_b0, k_w1, k_b1, k_x2 = jax.random.split(key, 6)

    # Deterministic parameter init mimicking torch.nn.Linear default
    # (uniform in [-1/sqrt(fan_in), 1/sqrt(fan_in)]).
    bound = 1.0 / jnp.sqrt(D)
    w0 = jax.random.uniform(k_w0, (D, D), jnp.float32, -bound, bound)
    b0 = jax.random.uniform(k_b0, (D,), jnp.float32, -bound, bound)
    w1 = jax.random.uniform(k_w1, (D, M), jnp.float32, -bound, bound)
    b1 = jax.random.uniform(k_b1, (M,), jnp.float32, -bound, bound)

    # Small shape matching the module spec (B=2).
    B = 2
    x = jax.random.normal(k_x, (B, D), dtype=jnp.float32)
    out = deep_probability(x, w0, b0, w1, b1)
    jax.block_until_ready(out)
    ref = reference(x, w0, b0, w1, b1)
    assert out.shape == (B, M), out.shape
    # bf16 MXU inputs + approx-reciprocal sigmoid -> loosened tolerance.
    assert jnp.allclose(out, ref, atol=2e-2, rtol=2e-2), "mismatch (small B)"

    # Larger, non-tile-multiple batch to exercise ragged blocks + multi-step grid.
    B2 = 600
    x2 = jax.random.normal(k_x2, (B2, D), dtype=jnp.float32)
    out2 = deep_probability(x2, w0, b0, w1, b1)
    jax.block_until_ready(out2)
    ref2 = reference(x2, w0, b0, w1, b1)
    assert out2.shape == (B2, M), out2.shape
    assert jnp.allclose(out2, ref2, atol=2e-2, rtol=2e-2), "mismatch (tiled B)"

    print("KERNEL_OK")
</pallas_src>

<mosaic_0001>
module attributes {stable_mosaic.version = 11 : i64} {
  func.func @deep_probability_kernel(%arg0: i32, %arg1: memref<8x128xf32, #tpu.memory_space<vmem>>, %arg2: memref<128x128xbf16, #tpu.memory_space<vmem>>, %arg3: memref<1x128xf32, #tpu.memory_space<vmem>>, %arg4: memref<128x32xbf16, #tpu.memory_space<vmem>>, %arg5: memref<1x32xf32, #tpu.memory_space<vmem>>, %arg6: memref<8x32xf32, #tpu.memory_space<vmem>>) attributes {dimension_semantics = [#tpu.dimension_semantics<parallel>], iteration_bounds = array<i64: 1>, scalar_prefetch = 0 : i64, scratch_operands = 0 : i64, tpu.core_type = #tpu.core_type<tc>, window_params = [{transform_indices = @transform_0, window_bounds = array<i64: 8, 128>}, {pipeline_mode = #tpu.pipeline_mode<synchronous>, transform_indices = @transform_1, window_bounds = array<i64: 128, 128>}, {pipeline_mode = #tpu.pipeline_mode<synchronous>, transform_indices = @transform_2, window_bounds = array<i64: 1, 128>}, {pipeline_mode = #tpu.pipeline_mode<synchronous>, transform_indices = @transform_3, window_bounds = array<i64: 128, 32>}, {pipeline_mode = #tpu.pipeline_mode<synchronous>, transform_indices = @transform_4, window_bounds = array<i64: 1, 32>}, {transform_indices = @transform_5, window_bounds = array<i64: 8, 32>}]} {
    %c0 = arith.constant 0 : index
    %c0_0 = arith.constant 0 : index
    %0 = vector.load %arg1[%c0, %c0_0] : memref<8x128xf32, #tpu.memory_space<vmem>>, vector<8x128xf32>
    %1 = arith.truncf %0 : vector<8x128xf32> to vector<8x128xbf16>
    %c0_1 = arith.constant 0 : index
    %c0_2 = arith.constant 0 : index
    %2 = vector.load %arg2[%c0_1, %c0_2] : memref<128x128xbf16, #tpu.memory_space<vmem>>, vector<128x128xbf16>
    %cst = arith.constant dense<0.000000e+00> : vector<8x128xf32>
    %3 = tpu.matmul %1, %2, %cst {dimension_numbers = #tpu.dot_dimension_numbers<[1], [0], [0], [1], [0, 0, 1, 1], [], []>} : vector<8x128xbf16>, vector<128x128xbf16>, vector<8x128xf32> -> vector<8x128xf32>
    %c0_3 = arith.constant 0 : index
    %c0_4 = arith.constant 0 : index
    %4 = vector.load %arg3[%c0_3, %c0_4] : memref<1x128xf32, #tpu.memory_space<vmem>>, vector<1x128xf32>
    %5 = vector.broadcast %4 : vector<1x128xf32> to vector<8x128xf32>
    %6 = arith.addf %3, %5 : vector<8x128xf32>
    %cst_5 = arith.constant 2.000000e-01 : f32
    %7 = vector.broadcast %cst_5 : f32 to vector<8x128xf32>
    %8 = arith.mulf %7, %6 : vector<8x128xf32>
    %9 = arith.maximumf %6, %8 : vector<8x128xf32>
    %10 = arith.truncf %9 : vector<8x128xf32> to vector<8x128xbf16>
    %c0_6 = arith.constant 0 : index
    %c0_7 = arith.constant 0 : index
    %11 = vector.load %arg4[%c0_6, %c0_7] : memref<128x32xbf16, #tpu.memory_space<vmem>>, vector<128x32xbf16>
    %cst_8 = arith.constant dense<0.000000e+00> : vector<8x32xf32>
    %12 = tpu.matmul %10, %11, %cst_8 {dimension_numbers = #tpu.dot_dimension_numbers<[1], [0], [0], [1], [0, 0, 1, 1], [], []>} : vector<8x128xbf16>, vector<128x32xbf16>, vector<8x32xf32> -> vector<8x32xf32>
    %c0_9 = arith.constant 0 : index
    %c0_10 = arith.constant 0 : index
    %13 = vector.load %arg5[%c0_9, %c0_10] : memref<1x32xf32, #tpu.memory_space<vmem>>, vector<1x32xf32>
    %14 = vector.broadcast %13 : vector<1x32xf32> to vector<8x32xf32>
    %15 = arith.addf %12, %14 : vector<8x32xf32>
    %16 = math.absf %15 : vector<8x32xf32>
    %cst_11 = arith.constant 0.000000e+00 : f32
    %17 = vector.broadcast %cst_11 : f32 to vector<8x32xf32>
    %18 = arith.subf %17, %16 : vector<8x32xf32>
    %19 = math.exp %18 : vector<8x32xf32>
    %cst_12 = arith.constant 1.000000e+00 : f32
    %20 = vector.broadcast %cst_12 : f32 to vector<8x32xf32>
    %21 = arith.addf %20, %19 : vector<8x32xf32>
    %22 = tpu.reciprocal %21 {approx = true} : vector<8x32xf32> -> vector<8x32xf32>
    %cst_13 = arith.constant 0.000000e+00 : f32
    %23 = vector.broadcast %cst_13 : f32 to vector<8x32xf32>
    %24 = arith.cmpf oge, %15, %23 : vector<8x32xf32>
    %25 = arith.mulf %19, %22 : vector<8x32xf32>
    %26 = arith.select %24, %22, %25 : vector<8x32xi1>, vector<8x32xf32>
    %c0_14 = arith.constant 0 : index
    %c0_15 = arith.constant 0 : index
    %27 = vector.load %arg6[%c0_14, %c0_15] : memref<8x32xf32, #tpu.memory_space<vmem>>, vector<8x32xf32>
    tpu.vector_store %arg6[%c0_14, %c0_15], %26 {strides = array<i32>} : memref<8x32xf32, #tpu.memory_space<vmem>>, vector<8x32xf32>,
    return
  }
  func.func @transform_0(%arg0: i32) -> (i32, i32) {
    %c0_i32 = arith.constant 0 : i32
    %c0_i32_0 = arith.constant 0 : i32
    return %arg0, %c0_i32 : i32, i32
  }
  func.func @transform_1(%arg0: i32) -> (i32, i32) {
    %c0_i32 = arith.constant 0 : i32
    %c0_i32_0 = arith.constant 0 : i32
    %c0_i32_1 = arith.constant 0 : i32
    return %c0_i32, %c0_i32_0 : i32, i32
  }
  func.func @transform_2(%arg0: i32) -> (i32, i32) {
    %c0_i32 = arith.constant 0 : i32
    %c0_i32_0 = arith.constant 0 : i32
    %c0_i32_1 = arith.constant 0 : i32
    return %c0_i32, %c0_i32_0 : i32, i32
  }
  func.func @transform_3(%arg0: i32) -> (i32, i32) {
    %c0_i32 = arith.constant 0 : i32
    %c0_i32_0 = arith.constant 0 : i32
    %c0_i32_1 = arith.constant 0 : i32
    return %c0_i32, %c0_i32_0 : i32, i32
  }
  func.func @transform_4(%arg0: i32) -> (i32, i32) {
    %c0_i32 = arith.constant 0 : i32
    %c0_i32_0 = arith.constant 0 : i32
    %c0_i32_1 = arith.constant 0 : i32
    return %c0_i32, %c0_i32_0 : i32, i32
  }
  func.func @transform_5(%arg0: i32) -> (i32, i32) {
    %c0_i32 = arith.constant 0 : i32
    %c0_i32_0 = arith.constant 0 : i32
    return %arg0, %c0_i32 : i32, i32
  }
}

</mosaic_0001>

<llo_original>
// kernel: tpu_custom_call.1
$region0: #{tpu_custom_call.1}
  #allocation0 [shape = 'u32[]', space=smem, size = 0x4, offset = 0x4, fixed_abs, tag = 'smem constant byte address 0x4 - core index']
  #allocation1 [shape = 'u32[144,128]{1,0:T(1,128)}', space=vmem, size = 0x12000, scoped, tag = 'internal scratch']
  %s0 = inlined_call_operand.vmem [shape: f32[8,128], index: 0, kind: input, shape index: {}]
  %s1 = inlined_call_operand.vmem [shape: bf16[128,128], index: 1, kind: input, shape index: {}]
  %s2 = inlined_call_operand.vmem [shape: f32[1,128], index: 2, kind: input, shape index: {}]
  %s3 = inlined_call_operand.vmem [shape: bf16[128,32], index: 3, kind: input, shape index: {}]
  %s4 = inlined_call_operand.vmem [shape: f32[1,32], index: 4, kind: input, shape index: {}]
  %s5 = inlined_call_operand.hbm [shape: f32[8,32], index: 5, kind: output, shape index: {}]
  %s6 = sld [smem:[#allocation0]]
  $region30: #{tpu_custom_call.1} parent=0
    _
  %s8 = ssub.s32 1, %s6
  %s9 = scalar_select 0, %s8, %s6
  $region1: #{tpu_custom_call.1} parent=0
    #allocation2 [shape = 'u8[4096]{0}', space=vmem, size = 0x1000, scoped, tag = 'output window, operand 0, single buffered']
    #allocation3 [shape = 's32[1]{0}', space=sflag, size = 0x4, scoped, tag = 'scoped memory for tpu_custom_call.1']
    %10 = vsyncpa [#allocation3], 0
    // Predicated region
    $region2: #{tpu_custom_call.1} parent=1 // pred_check
      _
    $region3: #{tpu_custom_call.1} parent=1 // pred_check_branch
      %12 = sbr.rel (0) target = $region5
    $region4: #{tpu_custom_call.1} parent=1 // pred_region
      _
    $region5: #{tpu_custom_call.1} parent=1 // pred_fallthru
      _
    // Predicated region
    $region6: #{tpu_custom_call.1} parent=1 // pred_check
      _
    $region7: #{tpu_custom_call.1} parent=1 // pred_check_branch
      %14 = sbr.rel (0) target = $region9
    $region8: #{tpu_custom_call.1} parent=1 // pred_region
      _
    $region9: #{tpu_custom_call.1} parent=1 // pred_fallthru
      _
    // Predicated region
    $region10: #{tpu_custom_call.1} parent=1 // pred_check
      _
    $region11: #{tpu_custom_call.1} parent=1 // pred_check_branch
      %16 = sbr.rel (0) target = $region13
    $region12: #{tpu_custom_call.1} parent=1 // pred_region
      _
    $region13: #{tpu_custom_call.1} parent=1 // pred_fallthru
      _
    // Predicated region
    $region14: #{tpu_custom_call.1} parent=1 // pred_check
      _
    $region15: #{tpu_custom_call.1} parent=1 // pred_check_branch
      %18 = sbr.rel (0) target = $region17
    $region16: #{tpu_custom_call.1} parent=1 // pred_region
      _
    $region17: #{tpu_custom_call.1} parent=1 // pred_fallthru
      _
    // Predicated region
    $region18: #{tpu_custom_call.1} parent=1 // pred_check
      _
    $region19: #{tpu_custom_call.1} parent=1 // pred_check_branch
      %20 = sbr.rel (0) target = $region21
    $region20: #{tpu_custom_call.1} parent=1 // pred_region
      _
    $region21: #{tpu_custom_call.1} parent=1 // pred_fallthru
      _
    %v22 = vld [vmem:[%s0] sm:$0xff]
    %v23 = vpack.c.bf16 %v22, %v22
    %v24 = vld [vmem:[%s1] sm:$0xf]
    %v25 = vld [vmem:[%s1 + $0x4] sm:$0xf]
    %v26 = vld [vmem:[%s1 + $0x8] sm:$0xf]
    %v27 = vld [vmem:[%s1 + $0xc] sm:$0xf]
    %v28 = vld [vmem:[%s1 + $0x10] sm:$0xf]
    %v29 = vld [vmem:[%s1 + $0x14] sm:$0xf]
    %v30 = vld [vmem:[%s1 + $0x18] sm:$0xf]
    %v31 = vld [vmem:[%s1 + $0x1c] sm:$0xf]
    %v32 = vld [vmem:[%s1 + $0x20] sm:$0xf]
    %v33 = vld [vmem:[%s1 + $0x24] sm:$0xf]
    %v34 = vld [vmem:[%s1 + $0x28] sm:$0xf]
    %v35 = vld [vmem:[%s1 + $0x2c] sm:$0xf]
    %v36 = vld [vmem:[%s1 + $0x30] sm:$0xf]
    %v37 = vld [vmem:[%s1 + $0x34] sm:$0xf]
    %v38 = vld [vmem:[%s1 + $0x38] sm:$0xf]
    %v39 = vld [vmem:[%s1 + $0x3c] sm:$0xf]
    %v40 = vld [vmem:[%s2] sm:$0x1]
    %v42 = vlaneseq
    %v43 = vshrl.u32 %v42, 7
    %v44 = vsub.s32 0, %v43
    %v45 = vrot.slane %v40, %v44
    %v63 = vunpack.c.l.b16 %v24
    %v64 = vunpack.c.l.b16 %v25
    %v65 = vunpack.c.l.b16 %v26
    %v66 = vunpack.c.l.b16 %v27
    %v67 = vunpack.c.l.b16 %v28
    %v68 = vunpack.c.l.b16 %v29
    %v69 = vunpack.c.l.b16 %v30
    %v70 = vunpack.c.l.b16 %v31
    %v71 = vunpack.c.l.b16 %v32
    %v72 = vunpack.c.l.b16 %v33
    %v73 = vunpack.c.l.b16 %v34
    %v74 = vunpack.c.l.b16 %v35
    %v75 = vunpack.c.l.b16 %v36
    %v76 = vunpack.c.l.b16 %v37
    %v77 = vunpack.c.l.b16 %v38
    %v78 = vunpack.c.l.b16 %v39
    %v79 = vpack.c.b16 %v64, %v63
    %v80 = vpack.c.b16 %v66, %v65
    %v81 = vpack.c.b16 %v68, %v67
    %v82 = vpack.c.b16 %v70, %v69
    %v83 = vpack.c.b16 %v72, %v71
    %v84 = vpack.c.b16 %v74, %v73
    %v85 = vpack.c.b16 %v76, %v75
    %v86 = vpack.c.b16 %v78, %v77
    %95 = vmatprep.subr.bf16.mxu0 0
    %96 = vmatpush1.bf16.msra.mxu0 %v86
    %97 = vmatprep.subr.bf16.mxu0 0
    %98 = vmatpush1.bf16.msra.mxu0 %v85
    %99 = vmatprep.subr.bf16.mxu0 0
    %100 = vmatpush1.bf16.msra.mxu0 %v84
    %101 = vmatprep.subr.bf16.mxu0 0
    %102 = vmatpush1.bf16.msra.mxu0 %v83
    %103 = vmatprep.subr.bf16.mxu0 0
    %104 = vmatpush1.bf16.msra.mxu0 %v82
    %105 = vmatprep.subr.bf16.mxu0 0
    %106 = vmatpush1.bf16.msra.mxu0 %v81
    %107 = vmatprep.subr.bf16.mxu0 0
    %108 = vmatpush1.bf16.msra.mxu0 %v80
    %109 = vmatprep.subr.bf16.mxu0 0
    %110 = vmatpush1.bf16.msra.mxu0 %v79
    %111 = vmatprep.subr.bf16.mxu0 0
    %112 = vmatpush2.bf16.msra.mxu0 0
    %113 = vmatprep.subr.bf16.mxu0 0
    %114 = vmatpush2.bf16.msra.mxu0 0
    %115 = vmatprep.subr.bf16.mxu0 0
    %116 = vmatpush2.bf16.msra.mxu0 0
    %117 = vmatprep.subr.bf16.mxu0 0
    %118 = vmatpush2.bf16.msra.mxu0 0
    %119 = vmatprep.subr.bf16.mxu0 0
    %120 = vmatpush2.bf16.msra.mxu0 0
    %121 = vmatprep.subr.bf16.mxu0 0
    %122 = vmatpush2.bf16.msra.mxu0 0
    %123 = vmatprep.subr.bf16.mxu0 0
    %124 = vmatpush2.bf16.msra.mxu0 0
    %125 = vmatprep.subr.bf16.mxu0 0
    %126 = vmatpush2.bf16.msra.mxu0 0
    %127 = vmatprep.mubr.bf16.mxu0 0
    %128 = vmatmul.mubr.bf16.gmra.mxu0 %v23
    %v129 = vpop.f32.mrf.mxu0
    %v130 = vadd.f32 %v45, %v129
    %v131 = vpop.f32.mrf.mxu0
    %v132 = vpop.f32.mrf.mxu0
    %v133 = vpop.f32.mrf.mxu0
    %134 = vdwg.mxu0
    %v135 = vmul.f32 %v130, 0.2
    %v136 = vmax.f32 %v130, %v135
    %v137 = vpack.c.bf16 %v136, %v136
    %v138 = vld [vmem:[%s3] sm:$0xf]
    %v139 = vld [vmem:[%s3 + $0x4] sm:$0xf]
    %v140 = vld [vmem:[%s3 + $0x8] sm:$0xf]
    %v141 = vld [vmem:[%s3 + $0xc] sm:$0xf]
    %v142 = vld [vmem:[%s3 + $0x10] sm:$0xf]
    %v143 = vld [vmem:[%s3 + $0x14] sm:$0xf]
    %v144 = vld [vmem:[%s3 + $0x18] sm:$0xf]
    %v145 = vld [vmem:[%s3 + $0x1c] sm:$0xf]
    %v146 = vld [vmem:[%s3 + $0x20] sm:$0xf]
    %v147 = vld [vmem:[%s3 + $0x24] sm:$0xf]
    %v148 = vld [vmem:[%s3 + $0x28] sm:$0xf]
    %v149 = vld [vmem:[%s3 + $0x2c] sm:$0xf]
    %v150 = vld [vmem:[%s3 + $0x30] sm:$0xf]
    %v151 = vld [vmem:[%s3 + $0x34] sm:$0xf]
    %v152 = vld [vmem:[%s3 + $0x38] sm:$0xf]
    %v153 = vld [vmem:[%s3 + $0x3c] sm:$0xf]
    %v154 = vld [vmem:[%s4] sm:$0x1]
    %v156 = vlaneseq
    %v157 = vshrl.u32 %v156, 7
    %v158 = vsub.s32 0, %v157
    %v159 = vrot.slane %v154, %v158
    %v177 = vunpack.c.l.b16 %v138
    %v178 = vunpack.c.l.b16 %v139
    %v179 = vunpack.c.l.b16 %v140
    %v180 = vunpack.c.l.b16 %v141
    %v181 = vunpack.c.l.b16 %v142
    %v182 = vunpack.c.l.b16 %v143
    %v183 = vunpack.c.l.b16 %v144
    %v184 = vunpack.c.l.b16 %v145
    %v185 = vunpack.c.l.b16 %v146
    %v186 = vunpack.c.l.b16 %v147
    %v187 = vunpack.c.l.b16 %v148
    %v188 = vunpack.c.l.b16 %v149
    %v189 = vunpack.c.l.b16 %v150
    %v190 = vunpack.c.l.b16 %v151
    %v191 = vunpack.c.l.b16 %v152
    %v192 = vunpack.c.l.b16 %v153
    %v193 = vpack.c.b16 %v178, %v177
    %v194 = vpack.c.b16 %v180, %v179
    %v195 = vpack.c.b16 %v182, %v181
    %v196 = vpack.c.b16 %v184, %v183
    %v197 = vpack.c.b16 %v186, %v185
    %v198 = vpack.c.b16 %v188, %v187
    %v199 = vpack.c.b16 %v190, %v189
    %v200 = vpack.c.b16 %v192, %v191
    %209 = vmatprep.subr.bf16.mxu0 0
    %210 = vmatpush1.bf16.msra.mxu0 %v200
    %211 = vmatprep.subr.bf16.mxu0 0
    %212 = vmatpush1.bf16.msra.mxu0 %v199
    %213 = vmatprep.subr.bf16.mxu0 0
    %214 = vmatpush1.bf16.msra.mxu0 %v198
    %215 = vmatprep.subr.bf16.mxu0 0
    %216 = vmatpush1.bf16.msra.mxu0 %v197
    %217 = vmatprep.subr.bf16.mxu0 0
    %218 = vmatpush1.bf16.msra.mxu0 %v196
    %219 = vmatprep.subr.bf16.mxu0 0
    %220 = vmatpush1.bf16.msra.mxu0 %v195
    %221 = vmatprep.subr.bf16.mxu0 0
    %222 = vmatpush1.bf16.msra.mxu0 %v194
    %223 = vmatprep.subr.bf16.mxu0 0
    %224 = vmatpush1.bf16.msra.mxu0 %v193
    %225 = vmatprep.subr.bf16.mxu0 0
    %226 = vmatpush2.bf16.msra.mxu0 0
    %227 = vmatprep.subr.bf16.mxu0 0
    %228 = vmatpush2.bf16.msra.mxu0 0
    %229 = vmatprep.subr.bf16.mxu0 0
    %230 = vmatpush2.bf16.msra.mxu0 0
    %231 = vmatprep.subr.bf16.mxu0 0
    %232 = vmatpush2.bf16.msra.mxu0 0
    %233 = vmatprep.subr.bf16.mxu0 0
    %234 = vmatpush2.bf16.msra.mxu0 0
    %235 = vmatprep.subr.bf16.mxu0 0
    %236 = vmatpush2.bf16.msra.mxu0 0
    %237 = vmatprep.subr.bf16.mxu0 0
    %238 = vmatpush2.bf16.msra.mxu0 0
    %239 = vmatprep.subr.bf16.mxu0 0
    %240 = vmatpush2.bf16.msra.mxu0 0
    %241 = vmatprep.mubr.bf16.mxu0 0
    %242 = vmatmul.mubr.bf16.gmra.mxu0 %v137
    %v243 = vpop.f32.mrf.mxu0
    %v244 = vadd.f32 %v159, %v243
    %v245 = vpop.f32.mrf.mxu0
    %v246 = vpop.f32.mrf.mxu0
    %v247 = vpop.f32.mrf.mxu0
    %248 = vdwg.mxu0
    %v249 = vand.u32 2147483647, %v244
    %v250 = vsub.f32 0.0, %v249
    %v251 = vmul.f32 %v250, 1.442695
    %v252 = vpow.pop %v251
    %v253 = vadd.f32 %v252, 1.0
    %v254 = vrcp.pop %v253
    %vm255 = vcmp.ge.f32.partialorder %v244, 0.0
    %v256 = vmul.f32 %v252, %v254
    %v257 = vsel %vm255, %v254, %v256
    %vm258 = vcmask 261120
    %259 = vst.msk [vmem:[#allocation2] sm:$0xff] %vm258, %v257
    // Predicated region
    $region22: #{tpu_custom_call.1} parent=1 // pred_check
      _
    $region23: #{tpu_custom_call.1} parent=1 // pred_check_branch
      %261 = sbr.rel (0) target = $region25
    $region24: #{tpu_custom_call.1} parent=1 // pred_region
      %s263 = ssub.s32 128, 128
      %264 = vsyncadd [#allocation3], %s263
      %s266 = sshll.u32 [#allocation2], 4
      %s267 = int_to_ptr.vmem [resolvable:$true] %s266
      %269 = dma.vmem_to_hbm [thread:$0]  %s267, 128, %s5, [#allocation3]
    $region25: #{tpu_custom_call.1} parent=1 // pred_fallthru
      _
    // Predicated region
    $region26: #{tpu_custom_call.1} parent=1 // pred_check
      _
    $region27: #{tpu_custom_call.1} parent=1 // pred_check_branch
      %271 = sbr.rel (0) target = $region29
    $region28: #{tpu_custom_call.1} parent=1 // pred_region
      %272 = dma.done [#allocation3], 128
    $region29: #{tpu_custom_call.1} parent=1 // pred_fallthru
      _
    %273 = vsyncpa [#allocation3], 1

</llo_original>
